<compile_context>
chip_gen: v7x
topology: tpu7x:2x2x1
jax: 0.10.0
libtpu: 0.0.40
codegen_flags: <defaults>
</compile_context>

<pallas_src>
import functools

import jax
import jax.numpy as jnp
import numpy as np
from jax.experimental import pallas as pl
from jax.experimental.pallas import tpu as pltpu


def _round_up(x, m):
    return ((x + m - 1) // m) * m


def _sublane_rows(dtype):
    # Native sublane packing: f32 -> 8, bf16 -> 16, int8/fp8 -> 32.
    return max(8, 32 // jnp.dtype(dtype).itemsize)


def _vmem_capacity_bytes():
    try:
        cap = int(getattr(pltpu.get_tpu_info(), "vmem_capacity_bytes", 0))
        if cap > 0:
            return cap
    except Exception:
        pass
    return 64 * 1024 * 1024            # conservative fallback (v7x-sized)


def _plan_tiles(batch, d, hp, x_itemsize, w_itemsize, sublane):
    """Pick batch tile TB and vmem_limit_bytes from the real working set."""
    cap = _vmem_capacity_bytes()
    vmem_limit = min(max(int(cap * 0.70), 32 * 1024 * 1024), 100 * 1024 * 1024)
    budget = int(vmem_limit * 0.85)

    # Resident weights: W_enc + W_dec, single-buffered (pl.Buffered(1)).
    weights_bytes = 2 * d * hp * w_itemsize
    # Per-row bytes: double-buffered x stream + f32 intermediates
    # (x upcast for the diff, z, z*z, recon, diff/diff^2).
    per_row = 2 * d * x_itemsize + 4 * (3 * d + 2 * hp)

    avail = budget - weights_bytes - 256 * 1024
    if avail < per_row * sublane:
        raise NotImplementedError(
            "Feature dim too large for VMEM-resident weights; needs a K-tiled "
            "variant (see TODO(synk) above).")

    tb = (avail // per_row) // sublane * sublane
    tb = max(sublane, min(1024, tb, _round_up(max(batch, 1), sublane)))
    return int(tb), int(vmem_limit)


def _autoreg_loss_kernel(x_ref, wenc_ref, wdec_ref, recon_ref, autoreg_ref, *,
                         batch, tile_rows, tiles_per_core, compute_dtype):
    """One batch tile of the fused regressor forward + loss partial sums.

    x_ref:       (TB, D)   native dtype  VMEM (streamed over the grid)
    wenc_ref:    (D, Hp)   compute dtype VMEM (resident, single-buffered)
    wdec_ref:    (Hp, D)   compute dtype VMEM (resident, single-buffered)
    recon_ref:   (1, 1, 1) f32 per-core accumulator (sum of squared error)
    autoreg_ref: (1, 1, 1) f32 per-core accumulator (sum of ||z||^2)
    """
    c = pl.program_id(0)
    i = pl.program_id(1)

    # Zero this core's resident accumulators on its first step along the
    # accumulation ("arbitrary") axis.
    @pl.when(i == 0)
    def _init():
        recon_ref[...] = jnp.zeros_like(recon_ref)
        autoreg_ref[...] = jnp.zeros_like(autoreg_ref)

    x = x_ref[...]                                                   # (TB, D)

    # --- synthetic regressor forward (two MXU matmuls, f32 accumulation) ---
    z = jnp.dot(x.astype(compute_dtype), wenc_ref[...],
                preferred_element_type=jnp.float32)                  # (TB, Hp)
    recon = jnp.dot(z.astype(wdec_ref.dtype), wdec_ref[...],
                    preferred_element_type=jnp.float32)              # (TB, D)

    # Reconstruction diff against the *original-precision* x (matches module).
    diff = x.astype(jnp.float32) - recon

    # Lane-axis (XLU) reductions first -> per-row partials.
    ar_rows = jnp.sum(z * z, axis=-1, keepdims=True)                 # (TB, 1)
    rc_rows = jnp.sum(diff * diff, axis=-1, keepdims=True)           # (TB, 1)

    # Mask rows past the real batch (ragged last tile / clamped duplicate tiles).
    row0 = (c * tiles_per_core + i) * tile_rows
    rows = row0 + jax.lax.broadcasted_iota(jnp.int32, (tile_rows, 1), 0)
    valid = rows < batch
    ar_rows = jnp.where(valid, ar_rows, 0.0)
    rc_rows = jnp.where(valid, rc_rows, 0.0)

    autoreg_ref[...] += jnp.sum(ar_rows, axis=0, keepdims=True)[None]   # (1,1,1)
    recon_ref[...] += jnp.sum(rc_rows, axis=0, keepdims=True)[None]     # (1,1,1)


def autoregressive_loss_pallas(x_nchw, w_enc, w_dec, re_weight,
                               reduction="mean", retlosses=False,
                               compute_dtype=jnp.float32):
    """JAX wrapper mirroring AutoregressiveLoss.forward(x, retlosses=...)."""
    assert reduction in {"mean", "sum"}
    B = x_nchw.shape[0]
    D = int(np.prod(x_nchw.shape[1:]))
    Hid = w_enc.shape[1]
    assert w_enc.shape == (D, Hid) and w_dec.shape == (Hid, D)

    Hp = _round_up(Hid, 128)                       # lane-pad the hidden dim only

    x_itemsize = jnp.dtype(x_nchw.dtype).itemsize
    w_itemsize = jnp.dtype(compute_dtype).itemsize
    sub = _sublane_rows(x_nchw.dtype)
    TB, vmem_limit = _plan_tiles(B, D, Hp, x_itemsize, w_itemsize, sub)

    nt = -(-B // TB)                               # number of batch tiles
    NC = 2 if nt >= 2 else 1                       # v7x: use both TensorCores
    tpc = -(-nt // NC)                             # tiles per core
    last_tile = nt - 1
    grid = (NC, tpc)

    # x: flatten only (no HBM copy, no pad, no cast).
    x2d = x_nchw.reshape(B, D)

    # Weights are small: pad hidden dim to a lane multiple and cast once.
    w_enc_p = jnp.pad(w_enc.astype(compute_dtype), ((0, 0), (0, Hp - Hid)))
    w_dec_p = jnp.pad(w_dec.astype(compute_dtype), ((0, Hp - Hid), (0, 0)))

    kernel = functools.partial(_autoreg_loss_kernel, batch=B, tile_rows=TB,
                               tiles_per_core=tpc, compute_dtype=compute_dtype)

    flops = 4 * B * D * Hp + 6 * B * D
    bytes_accessed = B * D * x_itemsize + 2 * D * Hp * w_itemsize + NC * 2 * 4

    recon_p, autoreg_p = pl.pallas_call(
        kernel,
        out_shape=(jax.ShapeDtypeStruct((NC, 1, 1), jnp.float32),
                   jax.ShapeDtypeStruct((NC, 1, 1), jnp.float32)),
        grid_spec=pltpu.PrefetchScalarGridSpec(
            num_scalar_prefetch=0,
            grid=grid,
            in_specs=[
                # x: streamed (TB, D) tiles.  The clamp keeps the DMA in bounds;
                # in-kernel row masking zeroes any duplicated / ragged rows.
                pl.BlockSpec(
                    (TB, D),
                    lambda c, i: (jnp.minimum(c * tpc + i, last_tile), 0)),
                # Weights: VMEM-resident, constant index_map, single-buffered.
                pl.BlockSpec((D, Hp), lambda c, i: (0, 0),
                             pipeline_mode=pl.Buffered(buffer_count=1)),
                pl.BlockSpec((Hp, D), lambda c, i: (0, 0),
                             pipeline_mode=pl.Buffered(buffer_count=1)),
            ],
            out_specs=(pl.BlockSpec((1, 1, 1), lambda c, i: (c, 0, 0)),
                       pl.BlockSpec((1, 1, 1), lambda c, i: (c, 0, 0))),
        ),
        compiler_params=pltpu.CompilerParams(
            dimension_semantics=("parallel", "arbitrary"),
            vmem_limit_bytes=vmem_limit),
        cost_estimate=pl.CostEstimate(flops=flops, transcendentals=0,
                                      bytes_accessed=bytes_accessed),
    )(x2d, w_enc_p, w_dec_p)

    recon_sum = jnp.sum(recon_p)          # combine per-core partials
    autoreg_sum = jnp.sum(autoreg_p)
    if reduction == "mean":
        recon_sum = recon_sum / B
        autoreg_sum = autoreg_sum / B

    rw = jnp.float32(re_weight)
    total = (1.0 - rw) * autoreg_sum + rw * recon_sum
    if retlosses:
        return total, {"reconstruction": recon_sum,
                       "autoregressive": autoreg_sum,
                       "total": total}
    return total


def _reference(x_nchw, w_enc, w_dec, re_weight, reduction="mean",
               compute_dtype=jnp.float32):
    """Pure-JAX reference of the same synthetic regressor + loss."""
    B = x_nchw.shape[0]
    x2d = x_nchw.reshape(B, -1)
    we = w_enc.astype(compute_dtype)
    wd = w_dec.astype(compute_dtype)
    z = jnp.dot(x2d.astype(compute_dtype), we, preferred_element_type=jnp.float32)
    recon = jnp.dot(z.astype(compute_dtype), wd, preferred_element_type=jnp.float32)
    autoreg = jnp.sum(z * z)
    rl = jnp.sum((x2d.astype(jnp.float32) - recon) ** 2)
    if reduction == "mean":
        autoreg = autoreg / B
        rl = rl / B
    total = (1.0 - re_weight) * autoreg + re_weight * rl
    return total, rl, autoreg


if __name__ == "__main__":
    # Small shapes consistent with an NCHW image input.
    B, C, H, W = 2, 4, 16, 16
    D = C * H * W          # 1024
    HID = 32
    RE_WEIGHT = 0.5

    key = jax.random.PRNGKey(0)
    kx, ke, kd = jax.random.split(key, 3)
    x = jax.random.normal(kx, (B, C, H, W), dtype=jnp.float32)
    # Deterministic synthetic regressor parameters (linear encoder / decoder).
    w_enc = jax.random.normal(ke, (D, HID), dtype=jnp.float32) * 0.02
    w_dec = jax.random.normal(kd, (HID, D), dtype=jnp.float32) * 0.02

    # --- f32 path, reduction='mean' -------------------------------------
    total, losses = autoregressive_loss_pallas(x, w_enc, w_dec, RE_WEIGHT,
                                               reduction="mean", retlosses=True)
    total = jax.block_until_ready(total)
    ref_total, ref_rl, ref_ar = _reference(x, w_enc, w_dec, RE_WEIGHT, "mean")
    np.testing.assert_allclose(np.asarray(total), np.asarray(ref_total),
                               rtol=1e-4, atol=1e-4)
    np.testing.assert_allclose(np.asarray(losses["reconstruction"]),
                               np.asarray(ref_rl), rtol=1e-4, atol=1e-4)
    np.testing.assert_allclose(np.asarray(losses["autoregressive"]),
                               np.asarray(ref_ar), rtol=1e-4, atol=1e-4)

    # --- f32 path, reduction='sum' ---------------------------------------
    total_s = jax.block_until_ready(
        autoregressive_loss_pallas(x, w_enc, w_dec, RE_WEIGHT, reduction="sum"))
    ref_total_s, _, _ = _reference(x, w_enc, w_dec, RE_WEIGHT, "sum")
    np.testing.assert_allclose(np.asarray(total_s), np.asarray(ref_total_s),
                               rtol=1e-4, atol=1e-4)

    # --- bf16 MXU compute, f32 x stream & f32 accumulation ---------------
    total_bf, losses_bf = autoregressive_loss_pallas(
        x, w_enc, w_dec, RE_WEIGHT, reduction="mean", retlosses=True,
        compute_dtype=jnp.bfloat16)
    total_bf = jax.block_until_ready(total_bf)
    ref_total_bf, ref_rl_bf, ref_ar_bf = _reference(
        x, w_enc, w_dec, RE_WEIGHT, "mean", compute_dtype=jnp.bfloat16)
    np.testing.assert_allclose(np.asarray(total_bf), np.asarray(ref_total_bf),
                               rtol=1e-2, atol=1e-2)
    np.testing.assert_allclose(np.asarray(losses_bf["reconstruction"]),
                               np.asarray(ref_rl_bf), rtol=1e-2, atol=1e-2)
    np.testing.assert_allclose(np.asarray(losses_bf["autoregressive"]),
                               np.asarray(ref_ar_bf), rtol=1e-2, atol=1e-2)

    print("KERNEL_OK")
</pallas_src>

<mosaic_0001>
module attributes {stable_mosaic.version = 11 : i64} {
  func.func @_autoreg_loss_kernel(%arg0: i32, %arg1: i32, %arg2: memref<8x1024xf32, #tpu.memory_space<vmem>>, %arg3: memref<1024x128xf32, #tpu.memory_space<vmem>>, %arg4: memref<128x1024xf32, #tpu.memory_space<vmem>>, %arg5: memref<1x1x1xf32, #tpu.memory_space<vmem>>, %arg6: memref<1x1x1xf32, #tpu.memory_space<vmem>>) attributes {dimension_semantics = [#tpu.dimension_semantics<parallel>, #tpu.dimension_semantics<arbitrary>], iteration_bounds = array<i64: 1, 1>, scalar_prefetch = 0 : i64, scratch_operands = 0 : i64, tpu.core_type = #tpu.core_type<tc>, window_params = [{transform_indices = @transform_0, window_bounds = array<i64: 8, 1024>}, {pipeline_mode = #tpu.pipeline_mode<synchronous>, transform_indices = @transform_1, window_bounds = array<i64: 1024, 128>}, {pipeline_mode = #tpu.pipeline_mode<synchronous>, transform_indices = @transform_2, window_bounds = array<i64: 128, 1024>}, {transform_indices = @transform_3, window_bounds = array<i64: 1, 1, 1>}, {transform_indices = @transform_4, window_bounds = array<i64: 1, 1, 1>}]} {
    %c0_i32 = arith.constant 0 : i32
    %0 = arith.cmpi eq, %arg1, %c0_i32 : i32
    %1 = arith.extui %0 : i1 to i32
    %c0_i32_0 = arith.constant 0 : i32
    %2 = arith.cmpi ne, %1, %c0_i32_0 : i32
    scf.if %2 {
      %cst_25 = arith.constant 0.000000e+00 : f32
      %39 = vector.broadcast %cst_25 : f32 to vector<1x1x1xf32>
      %c0_26 = arith.constant 0 : index
      %c0_27 = arith.constant 0 : index
      %c0_28 = arith.constant 0 : index
      %40 = vector.load %arg5[%c0_26, %c0_27, %c0_28] : memref<1x1x1xf32, #tpu.memory_space<vmem>>, vector<1x1x1xf32>
      tpu.vector_store %arg5[%c0_26, %c0_27, %c0_28], %39 {strides = array<i32>} : memref<1x1x1xf32, #tpu.memory_space<vmem>>, vector<1x1x1xf32>,
      %cst_29 = arith.constant 0.000000e+00 : f32
      %41 = vector.broadcast %cst_29 : f32 to vector<1x1x1xf32>
      %c0_30 = arith.constant 0 : index
      %c0_31 = arith.constant 0 : index
      %c0_32 = arith.constant 0 : index
      %42 = vector.load %arg6[%c0_30, %c0_31, %c0_32] : memref<1x1x1xf32, #tpu.memory_space<vmem>>, vector<1x1x1xf32>
      tpu.vector_store %arg6[%c0_30, %c0_31, %c0_32], %41 {strides = array<i32>} : memref<1x1x1xf32, #tpu.memory_space<vmem>>, vector<1x1x1xf32>,
    } else {
    }
    %c0 = arith.constant 0 : index
    %c0_1 = arith.constant 0 : index
    %3 = vector.load %arg2[%c0, %c0_1] : memref<8x1024xf32, #tpu.memory_space<vmem>>, vector<8x1024xf32>
    %c0_2 = arith.constant 0 : index
    %c0_3 = arith.constant 0 : index
    %4 = vector.load %arg3[%c0_2, %c0_3] : memref<1024x128xf32, #tpu.memory_space<vmem>>, vector<1024x128xf32>
    %cst = arith.constant dense<0.000000e+00> : vector<8x128xf32>
    %5 = tpu.matmul %3, %4, %cst {dimension_numbers = #tpu.dot_dimension_numbers<[1], [0], [0], [1], [0, 0, 1, 1], [], []>} : vector<8x1024xf32>, vector<1024x128xf32>, vector<8x128xf32> -> vector<8x128xf32>
    %c0_4 = arith.constant 0 : index
    %c0_5 = arith.constant 0 : index
    %6 = vector.load %arg4[%c0_4, %c0_5] : memref<128x1024xf32, #tpu.memory_space<vmem>>, vector<128x1024xf32>
    %cst_6 = arith.constant dense<0.000000e+00> : vector<8x1024xf32>
    %7 = tpu.matmul %5, %6, %cst_6 {dimension_numbers = #tpu.dot_dimension_numbers<[1], [0], [0], [1], [0, 0, 1, 1], [], []>} : vector<8x128xf32>, vector<128x1024xf32>, vector<8x1024xf32> -> vector<8x1024xf32>
    %8 = arith.subf %3, %7 : vector<8x1024xf32>
    %9 = arith.mulf %5, %5 : vector<8x128xf32>
    %cst_7 = arith.constant dense<0.000000e+00> : vector<8xf32>
    %10 = vector.multi_reduction <add>, %9, %cst_7 [1] : vector<8x128xf32> to vector<8xf32>
    %11 = vector.shape_cast %10 : vector<8xf32> to vector<8x1xf32>
    %12 = arith.mulf %8, %8 : vector<8x1024xf32>
    %cst_8 = arith.constant dense<0.000000e+00> : vector<8xf32>
    %13 = vector.multi_reduction <add>, %12, %cst_8 [1] : vector<8x1024xf32> to vector<8xf32>
    %14 = vector.shape_cast %13 : vector<8xf32> to vector<8x1xf32>
    %c1_i32 = arith.constant 1 : i32
    %15 = arith.muli %arg0, %c1_i32 : i32
    %16 = arith.addi %15, %arg1 : i32
    %c8_i32 = arith.constant 8 : i32
    %17 = arith.muli %16, %c8_i32 : i32
    %18 = tpu.iota {dimensions = array<i32: 0>} : vector<8x1xi32>
    %19 = vector.broadcast %17 : i32 to vector<8x1xi32>
    %20 = arith.addi %19, %18 : vector<8x1xi32>
    %c2_i32 = arith.constant 2 : i32
    %21 = vector.broadcast %c2_i32 : i32 to vector<8x1xi32>
    %22 = arith.cmpi slt, %20, %21 : vector<8x1xi32>
    %cst_9 = arith.constant 0.000000e+00 : f32
    %23 = vector.broadcast %cst_9 : f32 to vector<8x1xf32>
    %24 = arith.select %22, %11, %23 : vector<8x1xi1>, vector<8x1xf32>
    %cst_10 = arith.constant 0.000000e+00 : f32
    %25 = vector.broadcast %cst_10 : f32 to vector<8x1xf32>
    %26 = arith.select %22, %14, %25 : vector<8x1xi1>, vector<8x1xf32>
    %c0_11 = arith.constant 0 : index
    %c0_12 = arith.constant 0 : index
    %c0_13 = arith.constant 0 : index
    %27 = vector.load %arg6[%c0_11, %c0_12, %c0_13] : memref<1x1x1xf32, #tpu.memory_space<vmem>>, vector<1x1x1xf32>
    %cst_14 = arith.constant dense<0.000000e+00> : vector<1xf32>
    %28 = vector.multi_reduction <add>, %24, %cst_14 [0] : vector<8x1xf32> to vector<1xf32>
    %29 = vector.shape_cast %28 : vector<1xf32> to vector<1x1xf32>
    %30 = vector.shape_cast %29 : vector<1x1xf32> to vector<1x1x1xf32>
    %31 = arith.addf %27, %30 : vector<1x1x1xf32>
    %c0_15 = arith.constant 0 : index
    %c0_16 = arith.constant 0 : index
    %c0_17 = arith.constant 0 : index
    %32 = vector.load %arg6[%c0_15, %c0_16, %c0_17] : memref<1x1x1xf32, #tpu.memory_space<vmem>>, vector<1x1x1xf32>
    tpu.vector_store %arg6[%c0_15, %c0_16, %c0_17], %31 {strides = array<i32>} : memref<1x1x1xf32, #tpu.memory_space<vmem>>, vector<1x1x1xf32>,
    %c0_18 = arith.constant 0 : index
    %c0_19 = arith.constant 0 : index
    %c0_20 = arith.constant 0 : index
    %33 = vector.load %arg5[%c0_18, %c0_19, %c0_20] : memref<1x1x1xf32, #tpu.memory_space<vmem>>, vector<1x1x1xf32>
    %cst_21 = arith.constant dense<0.000000e+00> : vector<1xf32>
    %34 = vector.multi_reduction <add>, %26, %cst_21 [0] : vector<8x1xf32> to vector<1xf32>
    %35 = vector.shape_cast %34 : vector<1xf32> to vector<1x1xf32>
    %36 = vector.shape_cast %35 : vector<1x1xf32> to vector<1x1x1xf32>
    %37 = arith.addf %33, %36 : vector<1x1x1xf32>
    %c0_22 = arith.constant 0 : index
    %c0_23 = arith.constant 0 : index
    %c0_24 = arith.constant 0 : index
    %38 = vector.load %arg5[%c0_22, %c0_23, %c0_24] : memref<1x1x1xf32, #tpu.memory_space<vmem>>, vector<1x1x1xf32>
    tpu.vector_store %arg5[%c0_22, %c0_23, %c0_24], %37 {strides = array<i32>} : memref<1x1x1xf32, #tpu.memory_space<vmem>>, vector<1x1x1xf32>,
    return
  }
  func.func @transform_0(%arg0: i32, %arg1: i32) -> (i32, i32) {
    %c1_i32 = arith.constant 1 : i32
    %0 = arith.muli %arg0, %c1_i32 : i32
    %1 = arith.addi %0, %arg1 : i32
    %c0_i32 = arith.constant 0 : i32
    %2 = arith.minsi %1, %c0_i32 : i32
    %c0_i32_0 = arith.constant 0 : i32
    %c0_i32_1 = arith.constant 0 : i32
    return %2, %c0_i32_0 : i32, i32
  }
  func.func @transform_1(%arg0: i32, %arg1: i32) -> (i32, i32) {
    %c0_i32 = arith.constant 0 : i32
    %c0_i32_0 = arith.constant 0 : i32
    %c0_i32_1 = arith.constant 0 : i32
    return %c0_i32, %c0_i32_0 : i32, i32
  }
  func.func @transform_2(%arg0: i32, %arg1: i32) -> (i32, i32) {
    %c0_i32 = arith.constant 0 : i32
    %c0_i32_0 = arith.constant 0 : i32
    %c0_i32_1 = arith.constant 0 : i32
    return %c0_i32, %c0_i32_0 : i32, i32
  }
  func.func @transform_3(%arg0: i32, %arg1: i32) -> (i32, i32, i32) {
    %c0_i32 = arith.constant 0 : i32
    %c0_i32_0 = arith.constant 0 : i32
    %c0_i32_1 = arith.constant 0 : i32
    return %arg0, %c0_i32, %c0_i32_0 : i32, i32, i32
  }
  func.func @transform_4(%arg0: i32, %arg1: i32) -> (i32, i32, i32) {
    %c0_i32 = arith.constant 0 : i32
    %c0_i32_0 = arith.constant 0 : i32
    %c0_i32_1 = arith.constant 0 : i32
    return %arg0, %c0_i32, %c0_i32_0 : i32, i32, i32
  }
}

</mosaic_0001>

<llo_original>
// kernel: tpu_custom_call.1
$region0: #{tpu_custom_call.1}
  #allocation0 [shape = 'u32[]', space=smem, size = 0x4, offset = 0x4, fixed_abs, tag = 'smem constant byte address 0x4 - core index']
  #allocation1 [shape = 'u32[144,128]{1,0:T(1,128)}', space=vmem, size = 0x12000, scoped, tag = 'internal scratch']
  %s0 = inlined_call_operand.hbm [shape: f32[2,1024], index: 0, kind: input, shape index: {}]
  %s1 = inlined_call_operand.hbm [shape: f32[1024,128], index: 1, kind: input, shape index: {}]
  %s2 = inlined_call_operand.hbm [shape: f32[128,1024], index: 2, kind: input, shape index: {}]
  %s3 = inlined_call_operand.hbm [shape: f32[1,1,1], index: 3, kind: output, shape index: {0}]
  %s4 = inlined_call_operand.hbm [shape: f32[1,1,1], index: 4, kind: output, shape index: {1}]
  %5 = xla_tuple %s3, %s4
  %s6 = sld [smem:[#allocation0]]
  $region46: #{tpu_custom_call.1} parent=0
    _
  %s8 = ssub.s32 1, %s6
  %s9 = scalar_select 0, %s8, %s6
  $region1: #{tpu_custom_call.1} parent=0
    #allocation2 [shape = 'u8[32768]{0}', space=vmem, size = 0x8000, scoped, tag = 'input window, operand 0, single buffered']
    #allocation3 [shape = 's32[1]{0}', space=sflag, size = 0x4, scoped, tag = 'scoped memory for tpu_custom_call.1']
    #allocation4 [shape = 's32[1]{0}', space=sflag, size = 0x4, scoped, tag = 'scoped memory for tpu_custom_call.1']
    #allocation5 [shape = 'u8[524288]{0}', space=vmem, size = 0x80000, scoped, tag = 'input window, operand 1, single buffered']
    #allocation6 [shape = 's32[1]{0}', space=sflag, size = 0x4, scoped, tag = 'scoped memory for tpu_custom_call.1']
    #allocation7 [shape = 'u8[524288]{0}', space=vmem, size = 0x80000, scoped, tag = 'input window, operand 2, single buffered']
    #allocation8 [shape = 'u8[512]{0}', space=vmem, size = 0x400, scoped, tag = 'output window, operand 0, single buffered']
    #allocation9 [shape = 'u8[512]{0}', space=vmem, size = 0x400, scoped, tag = 'output window, operand 1, single buffered']
    #allocation10 [shape = 's32[1]{0}', space=sflag, size = 0x4, scoped, tag = 'scoped memory for tpu_custom_call.1']
    %10 = vsyncpa [#allocation3], 0
    %11 = vsyncpa [#allocation6], 0
    %12 = vsyncpa [#allocation4], 0
    %13 = vsyncpa [#allocation10], 0
    // Predicated region
    $region2: #{tpu_custom_call.1} parent=1 // pred_check
      _
    $region3: #{tpu_custom_call.1} parent=1 // pred_check_branch
      %15 = sbr.rel (0) target = $region5
    $region4: #{tpu_custom_call.1} parent=1 // pred_region
      %s16 = sadd.s32 0, 0
      %p17 = scmp.lt.s32.totalorder %s16, 0
      %s18 = scalar_select %p17, %s16, 0
      %s19 = smul.u32 4, %s18
      %s20 = ssub.s32 1, %s19
      %s21 = smul.u32 32, %s20
      %s22 = smul.u32 %s21, 8
      %s24 = ssub.s32 1024, %s22
      %25 = vsyncadd [#allocation3], %s24
      %p26 = scmp.ne.s32.totalorder 0, %s22
      %s27 = smul.addr %s19, 8
      %s28 = smul.addr %s27, 32
      %s29 = scalar_lea.hbm %s0, %s28
      %s30 = smul.u32 16, %s20
      %s31 = sshll.u32 [#allocation2], 4
      %s32 = int_to_ptr.vmem [resolvable:$true] %s31
      %s33 = sshll.u32 %s30, 4
      %37 = dma.hbm_to_vmem [thread:$0]  (%p26), %s29, %s33, %s32, [#allocation3], 256, 256, 16
    $region5: #{tpu_custom_call.1} parent=1 // pred_fallthru
      _
    // Predicated region
    $region6: #{tpu_custom_call.1} parent=1 // pred_check
      _
    $region7: #{tpu_custom_call.1} parent=1 // pred_check_branch
      %39 = sbr.rel (0) target = $region9
    $region8: #{tpu_custom_call.1} parent=1 // pred_region
      %s41 = ssub.s32 16384, 16384
      %42 = vsyncadd [#allocation6], %s41
      %s43 = sshll.u32 [#allocation5], 4
      %s44 = int_to_ptr.vmem [resolvable:$true] %s43
      %49 = dma.hbm_to_vmem [thread:$0]  %s1, 16384, %s44, [#allocation6], 128, 128, 8
    $region9: #{tpu_custom_call.1} parent=1 // pred_fallthru
      _
    // Predicated region
    $region10: #{tpu_custom_call.1} parent=1 // pred_check
      _
    $region11: #{tpu_custom_call.1} parent=1 // pred_check_branch
      %51 = sbr.rel (0) target = $region13
    $region12: #{tpu_custom_call.1} parent=1 // pred_region
      %s53 = ssub.s32 16384, 16384
      %54 = vsyncadd [#allocation6], %s53
      %s55 = sshll.u32 [#allocation7], 4
      %s56 = int_to_ptr.vmem [resolvable:$true] %s55
      %61 = dma.hbm_to_vmem [thread:$0]  %s2, 16384, %s56, [#allocation6], 1024, 1024, 64
    $region13: #{tpu_custom_call.1} parent=1 // pred_fallthru
      _
    // Predicated region
    $region14: #{tpu_custom_call.1} parent=1 // pred_check
      _
    $region15: #{tpu_custom_call.1} parent=1 // pred_check_branch
      %63 = sbr.rel (0) target = $region17
    $region16: #{tpu_custom_call.1} parent=1 // pred_region
      %64 = dma.done [#allocation3], 1024
    $region17: #{tpu_custom_call.1} parent=1 // pred_fallthru
      _
    // Predicated region
    $region18: #{tpu_custom_call.1} parent=1 // pred_check
      _
    $region19: #{tpu_custom_call.1} parent=1 // pred_check_branch
      %66 = sbr.rel (0) target = $region21
    $region20: #{tpu_custom_call.1} parent=1 // pred_region
      %67 = dma.done [#allocation6], 16384
    $region21: #{tpu_custom_call.1} parent=1 // pred_fallthru
      _
    // Predicated region
    $region22: #{tpu_custom_call.1} parent=1 // pred_check
      _
    $region23: #{tpu_custom_call.1} parent=1 // pred_check_branch
      %69 = sbr.rel (0) target = $region25
    $region24: #{tpu_custom_call.1} parent=1 // pred_region
      %70 = dma.done [#allocation6], 16384
    $region25: #{tpu_custom_call.1} parent=1 // pred_fallthru
      _
    %s71 = sadd.s32 0, 0
    %p72 = scmp.lt.s32.totalorder %s71, 0
    %s73 = scalar_select %p72, %s71, 0
    %s74 = smul.u32 4, %s73
    %s75 = ssub.s32 1, %s74
    %s76 = smul.u32 32, %s75
    %s77 = smul.u32 %s76, 8
    %p78 = scmp.eq.s32.totalorder 0, 0
    // Predicated region
    $region26: #{tpu_custom_call.1} parent=1 // pred_check
      %p79 = pneg %p78
    $region27: #{tpu_custom_call.1} parent=1 // pred_check_branch
      %81 = sbr.rel (%p79) target = $region29
    $region28: #{tpu_custom_call.1} parent=1 // pred_region
      %vm82 = vcmask 0
      %83 = vst.msk [vmem:[#allocation8] sm:$0x1] %vm82, 0.0
      %84 = vst.msk [vmem:[#allocation9] sm:$0x1] %vm82, 0.0
    $region29: #{tpu_custom_call.1} parent=1 // pred_fallthru
      _
    %v85 = vld [vmem:[#allocation2] sm:$0xff]
    %v86 = vld [vmem:[#allocation2 + $0x8] sm:$0xff]
    %v87 = vld [vmem:[#allocation2 + $0x10] sm:$0xff]
    %v88 = vld [vmem:[#allocation2 + $0x18] sm:$0xff]
    %v89 = vld [vmem:[#allocation2 + $0x20] sm:$0xff]
    %v90 = vld [vmem:[#allocation2 + $0x28] sm:$0xff]
    %v91 = vld [vmem:[#allocation2 + $0x30] sm:$0xff]
    %v92 = vld [vmem:[#allocation2 + $0x38] sm:$0xff]
    %v93 = vld [vmem:[#allocation5] sm:$0xff]
    %v94 = vld [vmem:[#allocation5 + $0x8] sm:$0xff]
    %v95 = vld [vmem:[#allocation5 + $0x10] sm:$0xff]
    %v96 = vld [vmem:[#allocation5 + $0x18] sm:$0xff]
    %v97 = vld [vmem:[#allocation5 + $0x20] sm:$0xff]
    %v98 = vld [vmem:[#allocation5 + $0x28] sm:$0xff]
    %v99 = vld [vmem:[#allocation5 + $0x30] sm:$0xff]
    %v100 = vld [vmem:[#allocation5 + $0x38] sm:$0xff]
    %v101 = vld [vmem:[#allocation5 + $0x40] sm:$0xff]
    %v102 = vld [vmem:[#allocation5 + $0x48] sm:$0xff]
    %v103 = vld [vmem:[#allocation5 + $0x50] sm:$0xff]
    %v104 = vld [vmem:[#allocation5 + $0x58] sm:$0xff]
    %v105 = vld [vmem:[#allocation5 + $0x60] sm:$0xff]
    %v106 = vld [vmem:[#allocation5 + $0x68] sm:$0xff]
    %v107 = vld [vmem:[#allocation5 + $0x70] sm:$0xff]
    %v108 = vld [vmem:[#allocation5 + $0x78] sm:$0xff]
    %v109 = vld [vmem:[#allocation5 + $0x80] sm:$0xff]
    %v110 = vld [vmem:[#allocation5 + $0x88] sm:$0xff]
    %v111 = vld [vmem:[#allocation5 + $0x90] sm:$0xff]
    %v112 = vld [vmem:[#allocation5 + $0x98] sm:$0xff]
    %v113 = vld [vmem:[#allocation5 + $0xa0] sm:$0xff]
    %v114 = vld [vmem:[#allocation5 + $0xa8] sm:$0xff]
    %v115 = vld [vmem:[#allocation5 + $0xb0] sm:$0xff]
    %v116 = vld [vmem:[#allocation5 + $0xb8] sm:$0xff]
    %v117 = vld [vmem:[#allocation5 + $0xc0] sm:$0xff]
    %v118 = vld [vmem:[#allocation5 + $0xc8] sm:$0xff]
    %v119 = vld [vmem:[#allocation5 + $0xd0] sm:$0xff]
    %v120 = vld [vmem:[#allocation5 + $0xd8] sm:$0xff]
    %v121 = vld [vmem:[#allocation5 + $0xe0] sm:$0xff]
    %v122 = vld [vmem:[#allocation5 + $0xe8] sm:$0xff]
    %v123 = vld [vmem:[#allocation5 + $0xf0] sm:$0xff]
    %v124 = vld [vmem:[#allocation5 + $0xf8] sm:$0xff]
    %v125 = vld [vmem:[#allocation5 + $0x100] sm:$0xff]
    %v126 = vld [vmem:[#allocation5 + $0x108] sm:$0xff]
    %v127 = vld [vmem:[#allocation5 + $0x110] sm:$0xff]
    %v128 = vld [vmem:[#allocation5 + $0x118] sm:$0xff]
    %v129 = vld [vmem:[#allocation5 + $0x120] sm:$0xff]
    %v130 = vld [vmem:[#allocation5 + $0x128] sm:$0xff]
    %v131 = vld [vmem:[#allocation5 + $0x130] sm:$0xff]
    %v132 = vld [vmem:[#allocation5 + $0x138] sm:$0xff]
    %v133 = vld [vmem:[#allocation5 + $0x140] sm:$0xff]
    %v134 = vld [vmem:[#allocation5 + $0x148] sm:$0xff]
    %v135 = vld [vmem:[#allocation5 + $0x150] sm:$0xff]
    %v136 = vld [vmem:[#allocation5 + $0x158] sm:$0xff]
    %v137 = vld [vmem:[#allocation5 + $0x160] sm:$0xff]
    %v138 = vld [vmem:[#allocation5 + $0x168] sm:$0xff]
    %v139 = vld [vmem:[#allocation5 + $0x170] sm:$0xff]
    %v140 = vld [vmem:[#allocation5 + $0x178] sm:$0xff]
    %v141 = vld [vmem:[#allocation5 + $0x180] sm:$0xff]
    %v142 = vld [vmem:[#allocation5 + $0x188] sm:$0xff]
    %v143 = vld [vmem:[#allocation5 + $0x190] sm:$0xff]
    %v144 = vld [vmem:[#allocation5 + $0x198] sm:$0xff]
    %v145 = vld [vmem:[#allocation5 + $0x1a0] sm:$0xff]
    %v146 = vld [vmem:[#allocation5 + $0x1a8] sm:$0xff]
    %v147 = vld [vmem:[#allocation5 + $0x1b0] sm:$0xff]
    %v148 = vld [vmem:[#allocation5 + $0x1b8] sm:$0xff]
    %v149 = vld [vmem:[#allocation5 + $0x1c0] sm:$0xff]
    %v150 = vld [vmem:[#allocation5 + $0x1c8] sm:$0xff]
    %v151 = vld [vmem:[#allocation5 + $0x1d0] sm:$0xff]
    %v152 = vld [vmem:[#allocation5 + $0x1d8] sm:$0xff]
    %v153 = vld [vmem:[#allocation5 + $0x1e0] sm:$0xff]
    %v154 = vld [vmem:[#allocation5 + $0x1e8] sm:$0xff]
    %v155 = vld [vmem:[#allocation5 + $0x1f0] sm:$0xff]
    %v156 = vld [vmem:[#allocation5 + $0x1f8] sm:$0xff]
    %v157 = vld [vmem:[#allocation5 + $0x200] sm:$0xff]
    %v158 = vld [vmem:[#allocation5 + $0x208] sm:$0xff]
    %v159 = vld [vmem:[#allocation5 + $0x210] sm:$0xff]
    %v160 = vld [vmem:[#allocation5 + $0x218] sm:$0xff]
    %v161 = vld [vmem:[#allocation5 + $0x220] sm:$0xff]
    %v162 = vld [vmem:[#allocation5 + $0x228] sm:$0xff]
    %v163 = vld [vmem:[#allocation5 + $0x230] sm:$0xff]
    %v164 = vld [vmem:[#allocation5 + $0x238] sm:$0xff]
    %v165 = vld [vmem:[#allocation5 + $0x240] sm:$0xff]
    %v166 = vld [vmem:[#allocation5 + $0x248] sm:$0xff]
    %v167 = vld [vmem:[#allocation5 + $0x250] sm:$0xff]
    %v168 = vld [vmem:[#allocation5 + $0x258] sm:$0xff]
    %v169 = vld [vmem:[#allocation5 + $0x260] sm:$0xff]
    %v170 = vld [vmem:[#allocation5 + $0x268] sm:$0xff]
    %v171 = vld [vmem:[#allocation5 + $0x270] sm:$0xff]
    %v172 = vld [vmem:[#allocation5 + $0x278] sm:$0xff]
    %v173 = vld [vmem:[#allocation5 + $0x280] sm:$0xff]
    %v174 = vld [vmem:[#allocation5 + $0x288] sm:$0xff]
    %v175 = vld [vmem:[#allocation5 + $0x290] sm:$0xff]
    %v176 = vld [vmem:[#allocation5 + $0x298] sm:$0xff]
    %v177 = vld [vmem:[#allocation5 + $0x2a0] sm:$0xff]
    %v178 = vld [vmem:[#allocation5 + $0x2a8] sm:$0xff]
    %v179 = vld [vmem:[#allocation5 + $0x2b0] sm:$0xff]
    %v180 = vld [vmem:[#allocation5 + $0x2b8] sm:$0xff]
    %v181 = vld [vmem:[#allocation5 + $0x2c0] sm:$0xff]
    %v182 = vld [vmem:[#allocation5 + $0x2c8] sm:$0xff]
    %v183 = vld [vmem:[#allocation5 + $0x2d0] sm:$0xff]
    %v184 = vld [vmem:[#allocation5 + $0x2d8] sm:$0xff]
    %v185 = vld [vmem:[#allocation5 + $0x2e0] sm:$0xff]
    %v186 = vld [vmem:[#allocation5 + $0x2e8] sm:$0xff]
    %v187 = vld [vmem:[#allocation5 + $0x2f0] sm:$0xff]
    %v188 = vld [vmem:[#allocation5 + $0x2f8] sm:$0xff]
    %v189 = vld [vmem:[#allocation5 + $0x300] sm:$0xff]
    %v190 = vld [vmem:[#allocation5 + $0x308] sm:$0xff]
    %v191 = vld [vmem:[#allocation5 + $0x310] sm:$0xff]
    %v192 = vld [vmem:[#allocation5 + $0x318] sm:$0xff]
    %v193 = vld [vmem:[#allocation5 + $0x320] sm:$0xff]
    %v194 = vld [vmem:[#allocation5 + $0x328] sm:$0xff]
    %v195 = vld [vmem:[#allocation5 + $0x330] sm:$0xff]
    %v196 = vld [vmem:[#allocation5 + $0x338] sm:$0xff]
    %v197 = vld [vmem:[#allocation5 + $0x340] sm:$0xff]
    %v198 = vld [vmem:[#allocation5 + $0x348] sm:$0xff]
    %v199 = vld [vmem:[#allocation5 + $0x350] sm:$0xff]
    %v200 = vld [vmem:[#allocation5 + $0x358] sm:$0xff]
    %v201 = vld [vmem:[#allocation5 + $0x360] sm:$0xff]
    %v202 = vld [vmem:[#allocation5 + $0x368] sm:$0xff]
    %v203 = vld [vmem:[#allocation5 + $0x370] sm:$0xff]
    %v204 = vld [vmem:[#allocation5 + $0x378] sm:$0xff]
    %v205 = vld [vmem:[#allocation5 + $0x380] sm:$0xff]
    %v206 = vld [vmem:[#allocation5 + $0x388] sm:$0xff]
    %v207 = vld [vmem:[#allocation5 + $0x390] sm:$0xff]
    %v208 = vld [vmem:[#allocation5 + $0x398] sm:$0xff]
    %v209 = vld [vmem:[#allocation5 + $0x3a0] sm:$0xff]
    %v210 = vld [vmem:[#allocation5 + $0x3a8] sm:$0xff]
    %v211 = vld [vmem:[#allocation5 + $0x3b0] sm:$0xff]
    %v212 = vld [vmem:[#allocation5 + $0x3b8] sm:$0xff]
    %v213 = vld [vmem:[#allocation5 + $0x3c0] sm:$0xff]
    %v214 = vld [vmem:[#allocation5 + $0x3c8] sm:$0xff]
    %v215 = vld [vmem:[#allocation5 + $0x3d0] sm:$0xff]
    %v216 = vld [vmem:[#allocation5 + $0x3d8] sm:$0xff]
    %v217 = vld [vmem:[#allocation5 + $0x3e0] sm:$0xff]
    %v218 = vld [vmem:[#allocation5 + $0x3e8] sm:$0xff]
    %v219 = vld [vmem:[#allocation5 + $0x3f0] sm:$0xff]
    %v220 = vld [vmem:[#allocation5 + $0x3f8] sm:$0xff]
    %v229 = vcombine.low %v85, %v87
    %v230 = vcombine.high %v85, %v87
    %v231 = vcombine.low %v89, %v91
    %v232 = vcombine.high %v89, %v91
    %v234 = vunpack.c.l.s4 1983009808
    %v235 = vunpack.c.0.s8 %v234
    %v236 = vlaneseq
    %v237 = vshrl.u32 %v236, 7
    %v238 = vsub.s32 %v235, %v237
    %v239 = vrot.slane %v229, %v238
    %v241 = vunpack.c.l.s4 1983009808
    %v242 = vunpack.c.0.s8 %v241
    %v243 = vlaneseq
    %v244 = vshrl.u32 %v243, 7
    %v245 = vsub.s32 %v242, %v244
    %v246 = vrot.slane %v230, %v245
    %v248 = vunpack.c.l.s4 1983009808
    %v249 = vunpack.c.0.s8 %v248
    %v250 = vlaneseq
    %v251 = vshrl.u32 %v250, 7
    %v252 = vsub.s32 %v249, %v251
    %v253 = vrot.slane %v231, %v252
    %v255 = vunpack.c.l.s4 1983009808
    %v256 = vunpack.c.0.s8 %v255
    %v257 = vlaneseq
    %v258 = vshrl.u32 %v257, 7
    %v259 = vsub.s32 %v256, %v258
    %v260 = vrot.slane %v232, %v259
    %v261 = vcombine.low %v239, %v253
    %v262 = vcombine.high %v239, %v253
    %v263 = vcombine.low %v246, %v260
    %v264 = vcombine.high %v246, %v260
    %v265 = vcombine.low %v86, %v88
    %v266 = vcombine.high %v86, %v88
    %v267 = vcombine.low %v90, %v92
    %v268 = vcombine.high %v90, %v92
    %v270 = vunpack.c.l.s4 1983009808
    %v271 = vunpack.c.0.s8 %v270
    %v272 = vlaneseq
    %v273 = vshrl.u32 %v272, 7
    %v274 = vsub.s32 %v271, %v273
    %v275 = vrot.slane %v265, %v274
    %v277 = vunpack.c.l.s4 1983009808
    %v278 = vunpack.c.0.s8 %v277
    %v279 = vlaneseq
    %v280 = vshrl.u32 %v279, 7
    %v281 = vsub.s32 %v278, %v280
    %v282 = vrot.slane %v266, %v281
    %v284 = vunpack.c.l.s4 1983009808
    %v285 = vunpack.c.0.s8 %v284
    %v286 = vlaneseq
    %v287 = vshrl.u32 %v286, 7
    %v288 = vsub.s32 %v285, %v287
    %v289 = vrot.slane %v267, %v288
    %v291 = vunpack.c.l.s4 1983009808
    %v292 = vunpack.c.0.s8 %v291
    %v293 = vlaneseq
    %v294 = vshrl.u32 %v293, 7
    %v295 = vsub.s32 %v292, %v294
    %v296 = vrot.slane %v268, %v295
    %v297 = vcombine.low %v275, %v289
    %v298 = vcombine.high %v275, %v289
    %v299 = vcombine.low %v282, %v296
    %v300 = vcombine.high %v282, %v296
    %309 = vmatprep.subr.mxu0 0.0
    %310 = vmatpush1.msra.mxu0 %v93
    %311 = vmatprep.subr.mxu0 0.0
    %312 = vmatpush1.msra.mxu0 %v94
    %313 = vmatprep.subr.mxu0 0.0
    %314 = vmatpush1.msra.mxu0 %v95
    %315 = vmatprep.subr.mxu0 0.0
    %316 = vmatpush1.msra.mxu0 %v96
    %317 = vmatprep.subr.mxu0 0.0
    %318 = vmatpush1.msra.mxu0 %v97
    %319 = vmatprep.subr.mxu0 0.0
    %320 = vmatpush1.msra.mxu0 %v98
    %321 = vmatprep.subr.mxu0 0.0
    %322 = vmatpush1.msra.mxu0 %v99
    %323 = vmatprep.subr.mxu0 0.0
    %324 = vmatpush1.msra.mxu0 %v100
    %325 = vmatprep.subr.mxu0 0.0
    %326 = vmatpush1.msra.mxu0 %v101
    %327 = vmatprep.subr.mxu0 0.0
    %328 = vmatpush1.msra.mxu0 %v102
    %329 = vmatprep.subr.mxu0 0.0
    %330 = vmatpush1.msra.mxu0 %v103
    %331 = vmatprep.subr.mxu0 0.0
    %332 = vmatpush1.msra.mxu0 %v104
    %333 = vmatprep.subr.mxu0 0.0
    %334 = vmatpush1.msra.mxu0 %v105
    %335 = vmatprep.subr.mxu0 0.0
    %336 = vmatpush1.msra.mxu0 %v106
    %337 = vmatprep.subr.mxu0 0.0
    %338 = vmatpush1.msra.mxu0 %v107
    %339 = vmatprep.subr.mxu0 0.0
    %340 = vmatpush1.msra.mxu0 %v108
    %341 = vmatprep.subr.mxu0 0.0
    %342 = vmatpush1.msra.mxu0 %v109
    %343 = vmatprep.subr.mxu0 0.0
    %344 = vmatpush1.msra.mxu0 %v110
    %345 = vmatprep.subr.mxu0 0.0
    %346 = vmatpush1.msra.mxu0 %v111
    %347 = vmatprep.subr.mxu0 0.0
    %348 = vmatpush1.msra.mxu0 %v112
    %349 = vmatprep.subr.mxu0 0.0
    %350 = vmatpush1.msra.mxu0 %v113
    %351 = vmatprep.subr.mxu0 0.0
    %352 = vmatpush1.msra.mxu0 %v114
    %353 = vmatprep.subr.mxu0 0.0
    %354 = vmatpush1.msra.mxu0 %v115
    %355 = vmatprep.subr.mxu0 0.0
    %356 = vmatpush1.msra.mxu0 %v116
    %357 = vmatprep.subr.mxu0 0.0
    %358 = vmatpush1.msra.mxu0 %v117
    %359 = vmatprep.subr.mxu0 0.0
    %360 = vmatpush1.msra.mxu0 %v118
    %361 = vmatprep.subr.mxu0 0.0
    %362 = vmatpush1.msra.mxu0 %v119
    %363 = vmatprep.subr.mxu0 0.0
    %364 = vmatpush1.msra.mxu0 %v120
    %365 = vmatprep.subr.mxu0 0.0
    %366 = vmatpush1.msra.mxu0 %v121
    %367 = vmatprep.subr.mxu0 0.0
    %368 = vmatpush1.msra.mxu0 %v122
    %369 = vmatprep.subr.mxu0 0.0
    %370 = vmatpush1.msra.mxu0 %v123
    %371 = vmatprep.subr.mxu0 0.0
    %372 = vmatpush1.msra.mxu0 %v124
    %373 = vmatprep.mubr.f32.mxu0 %v262
    %374 = vmatmul.mubr.f32.gmra.mrb[0].mxu0 %v261
    %v375 = vpop.f32.mrb[0].mxu0
    %v376 = vadd.f32 0.0, %v375
    %v377 = vpop.f32.mrb[0].mxu0
    %378 = vdwg.mxu0
    %379 = vmatprep.subr.mxu0 0.0
    %380 = vmatpush1.msra.mxu0 %v125
    %381 = vmatprep.subr.mxu0 0.0
    %382 = vmatpush1.msra.mxu0 %v126
    %383 = vmatprep.subr.mxu0 0.0
    %384 = vmatpush1.msra.mxu0 %v127
    %385 = vmatprep.subr.mxu0 0.0
    %386 = vmatpush1.msra.mxu0 %v128
    %387 = vmatprep.subr.mxu0 0.0
    %388 = vmatpush1.msra.mxu0 %v129
    %389 = vmatprep.subr.mxu0 0.0
    %390 = vmatpush1.msra.mxu0 %v130
    %391 = vmatprep.subr.mxu0 0.0
    %392 = vmatpush1.msra.mxu0 %v131
    %393 = vmatprep.subr.mxu0 0.0
    %394 = vmatpush1.msra.mxu0 %v132
    %395 = vmatprep.subr.mxu0 0.0
    %396 = vmatpush1.msra.mxu0 %v133
    %397 = vmatprep.subr.mxu0 0.0
    %398 = vmatpush1.msra.mxu0 %v134
    %399 = vmatprep.subr.mxu0 0.0
    %400 = vmatpush1.msra.mxu0 %v135
    %401 = vmatprep.subr.mxu0 0.0
    %402 = vmatpush1.msra.mxu0 %v136
    %403 = vmatprep.subr.mxu0 0.0
    %404 = vmatpush1.msra.mxu0 %v137
    %405 = vmatprep.subr.mxu0 0.0
    %406 = vmatpush1.msra.mxu0 %v138
    %407 = vmatprep.subr.mxu0 0.0
    %408 = vmatpush1.msra.mxu0 %v139
    %409 = vmatprep.subr.mxu0 0.0
    %410 = vmatpush1.msra.mxu0 %v140
    %411 = vmatprep.subr.mxu0 0.0
    %412 = vmatpush1.msra.mxu0 %v141
    %413 = vmatprep.subr.mxu0 0.0
    %414 = vmatpush1.msra.mxu0 %v142
    %415 = vmatprep.subr.mxu0 0.0
    %416 = vmatpush1.msra.mxu0 %v143
    %417 = vmatprep.subr.mxu0 0.0
    %418 = vmatpush1.msra.mxu0 %v144
    %419 = vmatprep.subr.mxu0 0.0
    %420 = vmatpush1.msra.mxu0 %v145
    %421 = vmatprep.subr.mxu0 0.0
    %422 = vmatpush1.msra.mxu0 %v146
    %423 = vmatprep.subr.mxu0 0.0
    %424 = vmatpush1.msra.mxu0 %v147
    %425 = vmatprep.subr.mxu0 0.0
    %426 = vmatpush1.msra.mxu0 %v148
    %427 = vmatprep.subr.mxu0 0.0
    %428 = vmatpush1.msra.mxu0 %v149
    %429 = vmatprep.subr.mxu0 0.0
    %430 = vmatpush1.msra.mxu0 %v150
    %431 = vmatprep.subr.mxu0 0.0
    %432 = vmatpush1.msra.mxu0 %v151
    %433 = vmatprep.subr.mxu0 0.0
    %434 = vmatpush1.msra.mxu0 %v152
    %435 = vmatprep.subr.mxu0 0.0
    %436 = vmatpush1.msra.mxu0 %v153
    %437 = vmatprep.subr.mxu0 0.0
    %438 = vmatpush1.msra.mxu0 %v154
    %439 = vmatprep.subr.mxu0 0.0
    %440 = vmatpush1.msra.mxu0 %v155
    %441 = vmatprep.subr.mxu0 0.0
    %442 = vmatpush1.msra.mxu0 %v156
    %443 = vmatprep.mubr.f32.mxu0 %v264
    %444 = vmatmul.mubr.f32.gmra.mrb[0].mxu0 %v263
    %v445 = vpop.f32.mrb[0].mxu0
    %v446 = vadd.f32 %v376, %v445
    %v447 = vpop.f32.mrb[0].mxu0
    %448 = vdwg.mxu0
    %449 = vmatprep.subr.mxu0 0.0
    %450 = vmatpush1.msra.mxu0 %v157
    %451 = vmatprep.subr.mxu0 0.0
    %452 = vmatpush1.msra.mxu0 %v158
    %453 = vmatprep.subr.mxu0 0.0
    %454 = vmatpush1.msra.mxu0 %v159
    %455 = vmatprep.subr.mxu0 0.0
    %456 = vmatpush1.msra.mxu0 %v160
    %457 = vmatprep.subr.mxu0 0.0
    %458 = vmatpush1.msra.mxu0 %v161
    %459 = vmatprep.subr.mxu0 0.0
    %460 = vmatpush1.msra.mxu0 %v162
    %461 = vmatprep.subr.mxu0 0.0
    %462 = vmatpush1.msra.mxu0 %v163
    %463 = vmatprep.subr.mxu0 0.0
    %464 = vmatpush1.msra.mxu0 %v164
    %465 = vmatprep.subr.mxu0 0.0
    %466 = vmatpush1.msra.mxu0 %v165
    %467 = vmatprep.subr.mxu0 0.0
    %468 = vmatpush1.msra.mxu0 %v166
    %469 = vmatprep.subr.mxu0 0.0
    %470 = vmatpush1.msra.mxu0 %v167
    %471 = vmatprep.subr.mxu0 0.0
    %472 = vmatpush1.msra.mxu0 %v168
    %473 = vmatprep.subr.mxu0 0.0
    %474 = vmatpush1.msra.mxu0 %v169
    %475 = vmatprep.subr.mxu0 0.0
    %476 = vmatpush1.msra.mxu0 %v170
    %477 = vmatprep.subr.mxu0 0.0
    %478 = vmatpush1.msra.mxu0 %v171
    %479 = vmatprep.subr.mxu0 0.0
    %480 = vmatpush1.msra.mxu0 %v172
    %481 = vmatprep.subr.mxu0 0.0
    %482 = vmatpush1.msra.mxu0 %v173
    %483 = vmatprep.subr.mxu0 0.0
    %484 = vmatpush1.msra.mxu0 %v174
    %485 = vmatprep.subr.mxu0 0.0
    %486 = vmatpush1.msra.mxu0 %v175
    %487 = vmatprep.subr.mxu0 0.0
    %488 = vmatpush1.msra.mxu0 %v176
    %489 = vmatprep.subr.mxu0 0.0
    %490 = vmatpush1.msra.mxu0 %v177
    %491 = vmatprep.subr.mxu0 0.0
    %492 = vmatpush1.msra.mxu0 %v178
    %493 = vmatprep.subr.mxu0 0.0
    %494 = vmatpush1.msra.mxu0 %v179
    %495 = vmatprep.subr.mxu0 0.0
    %496 = vmatpush1.msra.mxu0 %v180
    %497 = vmatprep.subr.mxu0 0.0
    %498 = vmatpush1.msra.mxu0 %v181
    %499 = vmatprep.subr.mxu0 0.0
    %500 = vmatpush1.msra.mxu0 %v182
    %501 = vmatprep.subr.mxu0 0.0
    %502 = vmatpush1.msra.mxu0 %v183
    %503 = vmatprep.subr.mxu0 0.0
    %504 = vmatpush1.msra.mxu0 %v184
    %505 = vmatprep.subr.mxu0 0.0
    %506 = vmatpush1.msra.mxu0 %v185
    %507 = vmatprep.subr.mxu0 0.0
    %508 = vmatpush1.msra.mxu0 %v186
    %509 = vmatprep.subr.mxu0 0.0
    %510 = vmatpush1.msra.mxu0 %v187
    %511 = vmatprep.subr.mxu0 0.0
    %512 = vmatpush1.msra.mxu0 %v188
    %513 = vmatprep.mubr.f32.mxu0 %v298
    %514 = vmatmul.mubr.f32.gmra.mrb[0].mxu0 %v297
    %v515 = vpop.f32.mrb[0].mxu0
    %v516 = vadd.f32 %v446, %v515
    %v517 = vpop.f32.mrb[0].mxu0
    %518 = vdwg.mxu0
    %519 = vmatprep.subr.mxu0 0.0
    %520 = vmatpush1.msra.mxu0 %v189
    %521 = vmatprep.subr.mxu0 0.0
    %522 = vmatpush1.msra.mxu0 %v190
    %523 = vmatprep.subr.mxu0 0.0
    %524 = vmatpush1.msra.mxu0 %v191
    %525 = vmatprep.subr.mxu0 0.0
    %526 = vmatpush1.msra.mxu0 %v192
    %527 = vmatprep.subr.mxu0 0.0
    %528 = vmatpush1.msra.mxu0 %v193
    %529 = vmatprep.subr.mxu0 0.0
    %530 = vmatpush1.msra.mxu0 %v194
    %531 = vmatprep.subr.mxu0 0.0
    %532 = vmatpush1.msra.mxu0 %v195
    %533 = vmatprep.subr.mxu0 0.0
    %534 = vmatpush1.msra.mxu0 %v196
    %535 = vmatprep.subr.mxu0 0.0
    %536 = vmatpush1.msra.mxu0 %v197
    %537 = vmatprep.subr.mxu0 0.0
    %538 = vmatpush1.msra.mxu0 %v198
    %539 = vmatprep.subr.mxu0 0.0
    %540 = vmatpush1.msra.mxu0 %v199
    %541 = vmatprep.subr.mxu0 0.0
    %542 = vmatpush1.msra.mxu0 %v200
    %543 = vmatprep.subr.mxu0 0.0
    %544 = vmatpush1.msra.mxu0 %v201
    %545 = vmatprep.subr.mxu0 0.0
    %546 = vmatpush1.msra.mxu0 %v202
    %547 = vmatprep.subr.mxu0 0.0
    %548 = vmatpush1.msra.mxu0 %v203
    %549 = vmatprep.subr.mxu0 0.0
    %550 = vmatpush1.msra.mxu0 %v204
    %551 = vmatprep.subr.mxu0 0.0
    %552 = vmatpush1.msra.mxu0 %v205
    %553 = vmatprep.subr.mxu0 0.0
    %554 = vmatpush1.msra.mxu0 %v206
    %555 = vmatprep.subr.mxu0 0.0
    %556 = vmatpush1.msra.mxu0 %v207
    %557 = vmatprep.subr.mxu0 0.0
    %558 = vmatpush1.msra.mxu0 %v208
    %559 = vmatprep.subr.mxu0 0.0
    %560 = vmatpush1.msra.mxu0 %v209
    %561 = vmatprep.subr.mxu0 0.0
    %562 = vmatpush1.msra.mxu0 %v210
    %563 = vmatprep.subr.mxu0 0.0
    %564 = vmatpush1.msra.mxu0 %v211
    %565 = vmatprep.subr.mxu0 0.0
    %566 = vmatpush1.msra.mxu0 %v212
    %567 = vmatprep.subr.mxu0 0.0
    %568 = vmatpush1.msra.mxu0 %v213
    %569 = vmatprep.subr.mxu0 0.0
    %570 = vmatpush1.msra.mxu0 %v214
    %571 = vmatprep.subr.mxu0 0.0
    %572 = vmatpush1.msra.mxu0 %v215
    %573 = vmatprep.subr.mxu0 0.0
    %574 = vmatpush1.msra.mxu0 %v216
    %575 = vmatprep.subr.mxu0 0.0
    %576 = vmatpush1.msra.mxu0 %v217
    %577 = vmatprep.subr.mxu0 0.0
    %578 = vmatpush1.msra.mxu0 %v218
    %579 = vmatprep.subr.mxu0 0.0
    %580 = vmatpush1.msra.mxu0 %v219
    %581 = vmatprep.subr.mxu0 0.0
    %582 = vmatpush1.msra.mxu0 %v220
    %583 = vmatprep.mubr.f32.mxu0 %v300
    %584 = vmatmul.mubr.f32.gmra.mrb[0].mxu0 %v299
    %v585 = vpop.f32.mrb[0].mxu0
    %v586 = vadd.f32 %v516, %v585
    %v587 = vpop.f32.mrb[0].mxu0
    %588 = vdwg.mxu0
    %v589 = vld [vmem:[#allocation7] sm:$0xff]
    %v590 = vld [vmem:[#allocation7 + $0x8] sm:$0xff]
    %v591 = vld [vmem:[#allocation7 + $0x10] sm:$0xff]
    %v592 = vld [vmem:[#allocation7 + $0x18] sm:$0xff]
    %v593 = vld [vmem:[#allocation7 + $0x20] sm:$0xff]
    %v594 = vld [vmem:[#allocation7 + $0x28] sm:$0xff]
    %v595 = vld [vmem:[#allocation7 + $0x30] sm:$0xff]
    %v596 = vld [vmem:[#allocation7 + $0x38] sm:$0xff]
    %v597 = vld [vmem:[#allocation7 + $0x40] sm:$0xff]
    %v598 = vld [vmem:[#allocation7 + $0x48] sm:$0xff]
    %v599 = vld [vmem:[#allocation7 + $0x50] sm:$0xff]
    %v600 = vld [vmem:[#allocation7 + $0x58] sm:$0xff]
    %v601 = vld [vmem:[#allocation7 + $0x60] sm:$0xff]
    %v602 = vld [vmem:[#allocation7 + $0x68] sm:$0xff]
    %v603 = vld [vmem:[#allocation7 + $0x70] sm:$0xff]
    %v604 = vld [vmem:[#allocation7 + $0x78] sm:$0xff]
    %v605 = vld [vmem:[#allocation7 + $0x80] sm:$0xff]
    %v606 = vld [vmem:[#allocation7 + $0x88] sm:$0xff]
    %v607 = vld [vmem:[#allocation7 + $0x90] sm:$0xff]
    %v608 = vld [vmem:[#allocation7 + $0x98] sm:$0xff]
    %v609 = vld [vmem:[#allocation7 + $0xa0] sm:$0xff]
    %v610 = vld [vmem:[#allocation7 + $0xa8] sm:$0xff]
    %v611 = vld [vmem:[#allocation7 + $0xb0] sm:$0xff]
    %v612 = vld [vmem:[#allocation7 + $0xb8] sm:$0xff]
    %v613 = vld [vmem:[#allocation7 + $0xc0] sm:$0xff]
    %v614 = vld [vmem:[#allocation7 + $0xc8] sm:$0xff]
    %v615 = vld [vmem:[#allocation7 + $0xd0] sm:$0xff]
    %v616 = vld [vmem:[#allocation7 + $0xd8] sm:$0xff]
    %v617 = vld [vmem:[#allocation7 + $0xe0] sm:$0xff]
    %v618 = vld [vmem:[#allocation7 + $0xe8] sm:$0xff]
    %v619 = vld [vmem:[#allocation7 + $0xf0] sm:$0xff]
    %v620 = vld [vmem:[#allocation7 + $0xf8] sm:$0xff]
    %v621 = vld [vmem:[#allocation7 + $0x100] sm:$0xff]
    %v622 = vld [vmem:[#allocation7 + $0x108] sm:$0xff]
    %v623 = vld [vmem:[#allocation7 + $0x110] sm:$0xff]
    %v624 = vld [vmem:[#allocation7 + $0x118] sm:$0xff]
    %v625 = vld [vmem:[#allocation7 + $0x120] sm:$0xff]
    %v626 = vld [vmem:[#allocation7 + $0x128] sm:$0xff]
    %v627 = vld [vmem:[#allocation7 + $0x130] sm:$0xff]
    %v628 = vld [vmem:[#allocation7 + $0x138] sm:$0xff]
    %v629 = vld [vmem:[#allocation7 + $0x140] sm:$0xff]
    %v630 = vld [vmem:[#allocation7 + $0x148] sm:$0xff]
    %v631 = vld [vmem:[#allocation7 + $0x150] sm:$0xff]
    %v632 = vld [vmem:[#allocation7 + $0x158] sm:$0xff]
    %v633 = vld [vmem:[#allocation7 + $0x160] sm:$0xff]
    %v634 = vld [vmem:[#allocation7 + $0x168] sm:$0xff]
    %v635 = vld [vmem:[#allocation7 + $0x170] sm:$0xff]
    %v636 = vld [vmem:[#allocation7 + $0x178] sm:$0xff]
    %v637 = vld [vmem:[#allocation7 + $0x180] sm:$0xff]
    %v638 = vld [vmem:[#allocation7 + $0x188] sm:$0xff]
    %v639 = vld [vmem:[#allocation7 + $0x190] sm:$0xff]
    %v640 = vld [vmem:[#allocation7 + $0x198] sm:$0xff]
    %v641 = vld [vmem:[#allocation7 + $0x1a0] sm:$0xff]
    %v642 = vld [vmem:[#allocation7 + $0x1a8] sm:$0xff]
    %v643 = vld [vmem:[#allocation7 + $0x1b0] sm:$0xff]
    %v644 = vld [vmem:[#allocation7 + $0x1b8] sm:$0xff]
    %v645 = vld [vmem:[#allocation7 + $0x1c0] sm:$0xff]
    %v646 = vld [vmem:[#allocation7 + $0x1c8] sm:$0xff]
    %v647 = vld [vmem:[#allocation7 + $0x1d0] sm:$0xff]
    %v648 = vld [vmem:[#allocation7 + $0x1d8] sm:$0xff]
    %v649 = vld [vmem:[#allocation7 + $0x1e0] sm:$0xff]
    %v650 = vld [vmem:[#allocation7 + $0x1e8] sm:$0xff]
    %v651 = vld [vmem:[#allocation7 + $0x1f0] sm:$0xff]
    %v652 = vld [vmem:[#allocation7 + $0x1f8] sm:$0xff]
    %v653 = vld [vmem:[#allocation7 + $0x200] sm:$0xff]
    %v654 = vld [vmem:[#allocation7 + $0x208] sm:$0xff]
    %v655 = vld [vmem:[#allocation7 + $0x210] sm:$0xff]
    %v656 = vld [vmem:[#allocation7 + $0x218] sm:$0xff]
    %v657 = vld [vmem:[#allocation7 + $0x220] sm:$0xff]
    %v658 = vld [vmem:[#allocation7 + $0x228] sm:$0xff]
    %v659 = vld [vmem:[#allocation7 + $0x230] sm:$0xff]
    %v660 = vld [vmem:[#allocation7 + $0x238] sm:$0xff]
    %v661 = vld [vmem:[#allocation7 + $0x240] sm:$0xff]
    %v662 = vld [vmem:[#allocation7 + $0x248] sm:$0xff]
    %v663 = vld [vmem:[#allocation7 + $0x250] sm:$0xff]
    %v664 = vld [vmem:[#allocation7 + $0x258] sm:$0xff]
    %v665 = vld [vmem:[#allocation7 + $0x260] sm:$0xff]
    %v666 = vld [vmem:[#allocation7 + $0x268] sm:$0xff]
    %v667 = vld [vmem:[#allocation7 + $0x270] sm:$0xff]
    %v668 = vld [vmem:[#allocation7 + $0x278] sm:$0xff]
    %v669 = vld [vmem:[#allocation7 + $0x280] sm:$0xff]
    %v670 = vld [vmem:[#allocation7 + $0x288] sm:$0xff]
    %v671 = vld [vmem:[#allocation7 + $0x290] sm:$0xff]
    %v672 = vld [vmem:[#allocation7 + $0x298] sm:$0xff]
    %v673 = vld [vmem:[#allocation7 + $0x2a0] sm:$0xff]
    %v674 = vld [vmem:[#allocation7 + $0x2a8] sm:$0xff]
    %v675 = vld [vmem:[#allocation7 + $0x2b0] sm:$0xff]
    %v676 = vld [vmem:[#allocation7 + $0x2b8] sm:$0xff]
    %v677 = vld [vmem:[#allocation7 + $0x2c0] sm:$0xff]
    %v678 = vld [vmem:[#allocation7 + $0x2c8] sm:$0xff]
    %v679 = vld [vmem:[#allocation7 + $0x2d0] sm:$0xff]
    %v680 = vld [vmem:[#allocation7 + $0x2d8] sm:$0xff]
    %v681 = vld [vmem:[#allocation7 + $0x2e0] sm:$0xff]
    %v682 = vld [vmem:[#allocation7 + $0x2e8] sm:$0xff]
    %v683 = vld [vmem:[#allocation7 + $0x2f0] sm:$0xff]
    %v684 = vld [vmem:[#allocation7 + $0x2f8] sm:$0xff]
    %v685 = vld [vmem:[#allocation7 + $0x300] sm:$0xff]
    %v686 = vld [vmem:[#allocation7 + $0x308] sm:$0xff]
    %v687 = vld [vmem:[#allocation7 + $0x310] sm:$0xff]
    %v688 = vld [vmem:[#allocation7 + $0x318] sm:$0xff]
    %v689 = vld [vmem:[#allocation7 + $0x320] sm:$0xff]
    %v690 = vld [vmem:[#allocation7 + $0x328] sm:$0xff]
    %v691 = vld [vmem:[#allocation7 + $0x330] sm:$0xff]
    %v692 = vld [vmem:[#allocation7 + $0x338] sm:$0xff]
    %v693 = vld [vmem:[#allocation7 + $0x340] sm:$0xff]
    %v694 = vld [vmem:[#allocation7 + $0x348] sm:$0xff]
    %v695 = vld [vmem:[#allocation7 + $0x350] sm:$0xff]
    %v696 = vld [vmem:[#allocation7 + $0x358] sm:$0xff]
    %v697 = vld [vmem:[#allocation7 + $0x360] sm:$0xff]
    %v698 = vld [vmem:[#allocation7 + $0x368] sm:$0xff]
    %v699 = vld [vmem:[#allocation7 + $0x370] sm:$0xff]
    %v700 = vld [vmem:[#allocation7 + $0x378] sm:$0xff]
    %v701 = vld [vmem:[#allocation7 + $0x380] sm:$0xff]
    %v702 = vld [vmem:[#allocation7 + $0x388] sm:$0xff]
    %v703 = vld [vmem:[#allocation7 + $0x390] sm:$0xff]
    %v704 = vld [vmem:[#allocation7 + $0x398] sm:$0xff]
    %v705 = vld [vmem:[#allocation7 + $0x3a0] sm:$0xff]
    %v706 = vld [vmem:[#allocation7 + $0x3a8] sm:$0xff]
    %v707 = vld [vmem:[#allocation7 + $0x3b0] sm:$0xff]
    %v708 = vld [vmem:[#allocation7 + $0x3b8] sm:$0xff]
    %v709 = vld [vmem:[#allocation7 + $0x3c0] sm:$0xff]
    %v710 = vld [vmem:[#allocation7 + $0x3c8] sm:$0xff]
    %v711 = vld [vmem:[#allocation7 + $0x3d0] sm:$0xff]
    %v712 = vld [vmem:[#allocation7 + $0x3d8] sm:$0xff]
    %v713 = vld [vmem:[#allocation7 + $0x3e0] sm:$0xff]
    %v714 = vld [vmem:[#allocation7 + $0x3e8] sm:$0xff]
    %v715 = vld [vmem:[#allocation7 + $0x3f0] sm:$0xff]
    %v716 = vld [vmem:[#allocation7 + $0x3f8] sm:$0xff]
    %717 = vmatprep.subr.mxu0 %v590
    %718 = vmatpush1.msra.mxu0 %v589
    %719 = vmatprep.subr.mxu0 %v598
    %720 = vmatpush1.msra.mxu0 %v597
    %721 = vmatprep.subr.mxu0 %v606
    %722 = vmatpush1.msra.mxu0 %v605
    %723 = vmatprep.subr.mxu0 %v614
    %724 = vmatpush1.msra.mxu0 %v613
    %725 = vmatprep.subr.mxu0 %v622
    %726 = vmatpush1.msra.mxu0 %v621
    %727 = vmatprep.subr.mxu0 %v630
    %728 = vmatpush1.msra.mxu0 %v629
    %729 = vmatprep.subr.mxu0 %v638
    %730 = vmatpush1.msra.mxu0 %v637
    %731 = vmatprep.subr.mxu0 %v646
    %732 = vmatpush1.msra.mxu0 %v645
    %733 = vmatprep.subr.mxu0 %v654
    %734 = vmatpush1.msra.mxu0 %v653
    %735 = vmatprep.subr.mxu0 %v662
    %736 = vmatpush1.msra.mxu0 %v661
    %737 = vmatprep.subr.mxu0 %v670
    %738 = vmatpush1.msra.mxu0 %v669
    %739 = vmatprep.subr.mxu0 %v678
    %740 = vmatpush1.msra.mxu0 %v677
    %741 = vmatprep.subr.mxu0 %v686
    %742 = vmatpush1.msra.mxu0 %v685
    %743 = vmatprep.subr.mxu0 %v694
    %744 = vmatpush1.msra.mxu0 %v693
    %745 = vmatprep.subr.mxu0 %v702
    %746 = vmatpush1.msra.mxu0 %v701
    %747 = vmatprep.subr.mxu0 %v710
    %748 = vmatpush1.msra.mxu0 %v709
    %749 = vmatprep.subr.mxu0 0.0
    %750 = vmatpush1.msra.mxu0 0.0
    %751 = vmatprep.subr.mxu0 0.0
    %752 = vmatpush1.msra.mxu0 0.0
    %753 = vmatprep.subr.mxu0 0.0
    %754 = vmatpush1.msra.mxu0 0.0
    %755 = vmatprep.subr.mxu0 0.0
    %756 = vmatpush1.msra.mxu0 0.0
    %757 = vmatprep.subr.mxu0 0.0
    %758 = vmatpush1.msra.mxu0 0.0
    %759 = vmatprep.subr.mxu0 0.0
    %760 = vmatpush1.msra.mxu0 0.0
    %761 = vmatprep.subr.mxu0 0.0
    %762 = vmatpush1.msra.mxu0 0.0
    %763 = vmatprep.subr.mxu0 0.0
    %764 = vmatpush1.msra.mxu0 0.0
    %765 = vmatprep.subr.mxu0 0.0
    %766 = vmatpush1.msra.mxu0 0.0
    %767 = vmatprep.subr.mxu0 0.0
    %768 = vmatpush1.msra.mxu0 0.0
    %769 = vmatprep.subr.mxu0 0.0
    %770 = vmatpush1.msra.mxu0 0.0
    %771 = vmatprep.subr.mxu0 0.0
    %772 = vmatpush1.msra.mxu0 0.0
    %773 = vmatprep.subr.mxu0 0.0
    %774 = vmatpush1.msra.mxu0 0.0
    %775 = vmatprep.subr.mxu0 0.0
    %776 = vmatpush1.msra.mxu0 0.0
    %777 = vmatprep.subr.mxu0 0.0
    %778 = vmatpush1.msra.mxu0 0.0
    %779 = vmatprep.subr.mxu0 0.0
    %780 = vmatpush1.msra.mxu0 0.0
    %781 = vmatprep.mubr.f32.mxu0 0.0
    %782 = vmatmul.mubr.f32.gmra.mrb[0].mxu0 %v586
    %v783 = vpop.f32.mrb[0].mxu0
    %v784 = vadd.f32 0.0, %v783
    %v785 = vpop.f32.mrb[0].mxu0
    %v786 = vadd.f32 0.0, %v785
    %787 = vdwg.mxu0
    %788 = vmatprep.subr.mxu0 %v592
    %789 = vmatpush1.msra.mxu0 %v591
    %790 = vmatprep.subr.mxu0 %v600
    %791 = vmatpush1.msra.mxu0 %v599
    %792 = vmatprep.subr.mxu0 %v608
    %793 = vmatpush1.msra.mxu0 %v607
    %794 = vmatprep.subr.mxu0 %v616
    %795 = vmatpush1.msra.mxu0 %v615
    %796 = vmatprep.subr.mxu0 %v624
    %797 = vmatpush1.msra.mxu0 %v623
    %798 = vmatprep.subr.mxu0 %v632
    %799 = vmatpush1.msra.mxu0 %v631
    %800 = vmatprep.subr.mxu0 %v640
    %801 = vmatpush1.msra.mxu0 %v639
    %802 = vmatprep.subr.mxu0 %v648
    %803 = vmatpush1.msra.mxu0 %v647
    %804 = vmatprep.subr.mxu0 %v656
    %805 = vmatpush1.msra.mxu0 %v655
    %806 = vmatprep.subr.mxu0 %v664
    %807 = vmatpush1.msra.mxu0 %v663
    %808 = vmatprep.subr.mxu0 %v672
    %809 = vmatpush1.msra.mxu0 %v671
    %810 = vmatprep.subr.mxu0 %v680
    %811 = vmatpush1.msra.mxu0 %v679
    %812 = vmatprep.subr.mxu0 %v688
    %813 = vmatpush1.msra.mxu0 %v687
    %814 = vmatprep.subr.mxu0 %v696
    %815 = vmatpush1.msra.mxu0 %v695
    %816 = vmatprep.subr.mxu0 %v704
    %817 = vmatpush1.msra.mxu0 %v703
    %818 = vmatprep.subr.mxu0 %v712
    %819 = vmatpush1.msra.mxu0 %v711
    %820 = vmatprep.subr.mxu0 0.0
    %821 = vmatpush1.msra.mxu0 0.0
    %822 = vmatprep.subr.mxu0 0.0
    %823 = vmatpush1.msra.mxu0 0.0
    %824 = vmatprep.subr.mxu0 0.0
    %825 = vmatpush1.msra.mxu0 0.0
    %826 = vmatprep.subr.mxu0 0.0
    %827 = vmatpush1.msra.mxu0 0.0
    %828 = vmatprep.subr.mxu0 0.0
    %829 = vmatpush1.msra.mxu0 0.0
    %830 = vmatprep.subr.mxu0 0.0
    %831 = vmatpush1.msra.mxu0 0.0
    %832 = vmatprep.subr.mxu0 0.0
    %833 = vmatpush1.msra.mxu0 0.0
    %834 = vmatprep.subr.mxu0 0.0
    %835 = vmatpush1.msra.mxu0 0.0
    %836 = vmatprep.subr.mxu0 0.0
    %837 = vmatpush1.msra.mxu0 0.0
    %838 = vmatprep.subr.mxu0 0.0
    %839 = vmatpush1.msra.mxu0 0.0
    %840 = vmatprep.subr.mxu0 0.0
    %841 = vmatpush1.msra.mxu0 0.0
    %842 = vmatprep.subr.mxu0 0.0
    %843 = vmatpush1.msra.mxu0 0.0
    %844 = vmatprep.subr.mxu0 0.0
    %845 = vmatpush1.msra.mxu0 0.0
    %846 = vmatprep.subr.mxu0 0.0
    %847 = vmatpush1.msra.mxu0 0.0
    %848 = vmatprep.subr.mxu0 0.0
    %849 = vmatpush1.msra.mxu0 0.0
    %850 = vmatprep.subr.mxu0 0.0
    %851 = vmatpush1.msra.mxu0 0.0
    %852 = vmatprep.mubr.f32.mxu0 0.0
    %853 = vmatmul.mubr.f32.gmra.mrb[0].mxu0 %v586
    %v854 = vpop.f32.mrb[0].mxu0
    %v855 = vadd.f32 0.0, %v854
    %v856 = vpop.f32.mrb[0].mxu0
    %v857 = vadd.f32 0.0, %v856
    %858 = vdwg.mxu0
    %859 = vmatprep.subr.mxu0 %v594
    %860 = vmatpush1.msra.mxu0 %v593
    %861 = vmatprep.subr.mxu0 %v602
    %862 = vmatpush1.msra.mxu0 %v601
    %863 = vmatprep.subr.mxu0 %v610
    %864 = vmatpush1.msra.mxu0 %v609
    %865 = vmatprep.subr.mxu0 %v618
    %866 = vmatpush1.msra.mxu0 %v617
    %867 = vmatprep.subr.mxu0 %v626
    %868 = vmatpush1.msra.mxu0 %v625
    %869 = vmatprep.subr.mxu0 %v634
    %870 = vmatpush1.msra.mxu0 %v633
    %871 = vmatprep.subr.mxu0 %v642
    %872 = vmatpush1.msra.mxu0 %v641
    %873 = vmatprep.subr.mxu0 %v650
    %874 = vmatpush1.msra.mxu0 %v649
    %875 = vmatprep.subr.mxu0 %v658
    %876 = vmatpush1.msra.mxu0 %v657
    %877 = vmatprep.subr.mxu0 %v666
    %878 = vmatpush1.msra.mxu0 %v665
    %879 = vmatprep.subr.mxu0 %v674
    %880 = vmatpush1.msra.mxu0 %v673
    %881 = vmatprep.subr.mxu0 %v682
    %882 = vmatpush1.msra.mxu0 %v681
    %883 = vmatprep.subr.mxu0 %v690
    %884 = vmatpush1.msra.mxu0 %v689
    %885 = vmatprep.subr.mxu0 %v698
    %886 = vmatpush1.msra.mxu0 %v697
    %887 = vmatprep.subr.mxu0 %v706
    %888 = vmatpush1.msra.mxu0 %v705
    %889 = vmatprep.subr.mxu0 %v714
    %890 = vmatpush1.msra.mxu0 %v713
    %891 = vmatprep.subr.mxu0 0.0
    %892 = vmatpush1.msra.mxu0 0.0
    %893 = vmatprep.subr.mxu0 0.0
    %894 = vmatpush1.msra.mxu0 0.0
    %895 = vmatprep.subr.mxu0 0.0
    %896 = vmatpush1.msra.mxu0 0.0
    %897 = vmatprep.subr.mxu0 0.0
    %898 = vmatpush1.msra.mxu0 0.0
    %899 = vmatprep.subr.mxu0 0.0
    %900 = vmatpush1.msra.mxu0 0.0
    %901 = vmatprep.subr.mxu0 0.0
    %902 = vmatpush1.msra.mxu0 0.0
    %903 = vmatprep.subr.mxu0 0.0
    %904 = vmatpush1.msra.mxu0 0.0
    %905 = vmatprep.subr.mxu0 0.0
    %906 = vmatpush1.msra.mxu0 0.0
    %907 = vmatprep.subr.mxu0 0.0
    %908 = vmatpush1.msra.mxu0 0.0
    %909 = vmatprep.subr.mxu0 0.0
    %910 = vmatpush1.msra.mxu0 0.0
    %911 = vmatprep.subr.mxu0 0.0
    %912 = vmatpush1.msra.mxu0 0.0
    %913 = vmatprep.subr.mxu0 0.0
    %914 = vmatpush1.msra.mxu0 0.0
    %915 = vmatprep.subr.mxu0 0.0
    %916 = vmatpush1.msra.mxu0 0.0
    %917 = vmatprep.subr.mxu0 0.0
    %918 = vmatpush1.msra.mxu0 0.0
    %919 = vmatprep.subr.mxu0 0.0
    %920 = vmatpush1.msra.mxu0 0.0
    %921 = vmatprep.subr.mxu0 0.0
    %922 = vmatpush1.msra.mxu0 0.0
    %923 = vmatprep.mubr.f32.mxu0 0.0
    %924 = vmatmul.mubr.f32.gmra.mrb[0].mxu0 %v586
    %v925 = vpop.f32.mrb[0].mxu0
    %v926 = vadd.f32 0.0, %v925
    %v927 = vpop.f32.mrb[0].mxu0
    %v928 = vadd.f32 0.0, %v927
    %929 = vdwg.mxu0
    %930 = vmatprep.subr.mxu0 %v596
    %931 = vmatpush1.msra.mxu0 %v595
    %932 = vmatprep.subr.mxu0 %v604
    %933 = vmatpush1.msra.mxu0 %v603
    %934 = vmatprep.subr.mxu0 %v612
    %935 = vmatpush1.msra.mxu0 %v611
    %936 = vmatprep.subr.mxu0 %v620
    %937 = vmatpush1.msra.mxu0 %v619
    %938 = vmatprep.subr.mxu0 %v628
    %939 = vmatpush1.msra.mxu0 %v627
    %940 = vmatprep.subr.mxu0 %v636
    %941 = vmatpush1.msra.mxu0 %v635
    %942 = vmatprep.subr.mxu0 %v644
    %943 = vmatpush1.msra.mxu0 %v643
    %944 = vmatprep.subr.mxu0 %v652
    %945 = vmatpush1.msra.mxu0 %v651
    %946 = vmatprep.subr.mxu0 %v660
    %947 = vmatpush1.msra.mxu0 %v659
    %948 = vmatprep.subr.mxu0 %v668
    %949 = vmatpush1.msra.mxu0 %v667
    %950 = vmatprep.subr.mxu0 %v676
    %951 = vmatpush1.msra.mxu0 %v675
    %952 = vmatprep.subr.mxu0 %v684
    %953 = vmatpush1.msra.mxu0 %v683
    %954 = vmatprep.subr.mxu0 %v692
    %955 = vmatpush1.msra.mxu0 %v691
    %956 = vmatprep.subr.mxu0 %v700
    %957 = vmatpush1.msra.mxu0 %v699
    %958 = vmatprep.subr.mxu0 %v708
    %959 = vmatpush1.msra.mxu0 %v707
    %960 = vmatprep.subr.mxu0 %v716
    %961 = vmatpush1.msra.mxu0 %v715
    %962 = vmatprep.subr.mxu0 0.0
    %963 = vmatpush1.msra.mxu0 0.0
    %964 = vmatprep.subr.mxu0 0.0
    %965 = vmatpush1.msra.mxu0 0.0
    %966 = vmatprep.subr.mxu0 0.0
    %967 = vmatpush1.msra.mxu0 0.0
    %968 = vmatprep.subr.mxu0 0.0
    %969 = vmatpush1.msra.mxu0 0.0
    %970 = vmatprep.subr.mxu0 0.0
    %971 = vmatpush1.msra.mxu0 0.0
    %972 = vmatprep.subr.mxu0 0.0
    %973 = vmatpush1.msra.mxu0 0.0
    %974 = vmatprep.subr.mxu0 0.0
    %975 = vmatpush1.msra.mxu0 0.0
    %976 = vmatprep.subr.mxu0 0.0
    %977 = vmatpush1.msra.mxu0 0.0
    %978 = vmatprep.subr.mxu0 0.0
    %979 = vmatpush1.msra.mxu0 0.0
    %980 = vmatprep.subr.mxu0 0.0
    %981 = vmatpush1.msra.mxu0 0.0
    %982 = vmatprep.subr.mxu0 0.0
    %983 = vmatpush1.msra.mxu0 0.0
    %984 = vmatprep.subr.mxu0 0.0
    %985 = vmatpush1.msra.mxu0 0.0
    %986 = vmatprep.subr.mxu0 0.0
    %987 = vmatpush1.msra.mxu0 0.0
    %988 = vmatprep.subr.mxu0 0.0
    %989 = vmatpush1.msra.mxu0 0.0
    %990 = vmatprep.subr.mxu0 0.0
    %991 = vmatpush1.msra.mxu0 0.0
    %992 = vmatprep.subr.mxu0 0.0
    %993 = vmatpush1.msra.mxu0 0.0
    %994 = vmatprep.mubr.f32.mxu0 0.0
    %995 = vmatmul.mubr.f32.gmra.mrb[0].mxu0 %v586
    %v996 = vpop.f32.mrb[0].mxu0
    %v997 = vadd.f32 0.0, %v996
    %v998 = vpop.f32.mrb[0].mxu0
    %v999 = vadd.f32 0.0, %v998
    %1000 = vdwg.mxu0
    %v1009 = vcombine.low %v784, %v786
    %v1010 = vcombine.high %v784, %v786
    %v1011 = vcombine.low %v855, %v857
    %v1012 = vcombine.high %v855, %v857
    %v1014 = vunpack.c.l.s4 1983009808
    %v1015 = vunpack.c.0.s8 %v1014
    %v1016 = vlaneseq
    %v1017 = vshrl.u32 %v1016, 7
    %v1018 = vsub.s32 %v1015, %v1017
    %v1019 = vrot.slane %v1009, %v1018
    %v1021 = vunpack.c.l.s4 1983009808
    %v1022 = vunpack.c.0.s8 %v1021
    %v1023 = vlaneseq
    %v1024 = vshrl.u32 %v1023, 7
    %v1025 = vsub.s32 %v1022, %v1024
    %v1026 = vrot.slane %v1010, %v1025
    %v1028 = vunpack.c.l.s4 1983009808
    %v1029 = vunpack.c.0.s8 %v1028
    %v1030 = vlaneseq
    %v1031 = vshrl.u32 %v1030, 7
    %v1032 = vsub.s32 %v1029, %v1031
    %v1033 = vrot.slane %v1011, %v1032
    %v1035 = vunpack.c.l.s4 1983009808
    %v1036 = vunpack.c.0.s8 %v1035
    %v1037 = vlaneseq
    %v1038 = vshrl.u32 %v1037, 7
    %v1039 = vsub.s32 %v1036, %v1038
    %v1040 = vrot.slane %v1012, %v1039
    %v1041 = vcombine.low %v1019, %v1033
    %v1042 = vcombine.high %v1019, %v1033
    %v1043 = vcombine.low %v1026, %v1040
    %v1044 = vcombine.high %v1026, %v1040
    %v1045 = vcombine.low %v926, %v928
    %v1046 = vcombine.high %v926, %v928
    %v1047 = vcombine.low %v997, %v999
    %v1048 = vcombine.high %v997, %v999
    %v1050 = vunpack.c.l.s4 1983009808
    %v1051 = vunpack.c.0.s8 %v1050
    %v1052 = vlaneseq
    %v1053 = vshrl.u32 %v1052, 7
    %v1054 = vsub.s32 %v1051, %v1053
    %v1055 = vrot.slane %v1045, %v1054
    %v1057 = vunpack.c.l.s4 1983009808
    %v1058 = vunpack.c.0.s8 %v1057
    %v1059 = vlaneseq
    %v1060 = vshrl.u32 %v1059, 7
    %v1061 = vsub.s32 %v1058, %v1060
    %v1062 = vrot.slane %v1046, %v1061
    %v1064 = vunpack.c.l.s4 1983009808
    %v1065 = vunpack.c.0.s8 %v1064
    %v1066 = vlaneseq
    %v1067 = vshrl.u32 %v1066, 7
    %v1068 = vsub.s32 %v1065, %v1067
    %v1069 = vrot.slane %v1047, %v1068
    %v1071 = vunpack.c.l.s4 1983009808
    %v1072 = vunpack.c.0.s8 %v1071
    %v1073 = vlaneseq
    %v1074 = vshrl.u32 %v1073, 7
    %v1075 = vsub.s32 %v1072, %v1074
    %v1076 = vrot.slane %v1048, %v1075
    %v1077 = vcombine.low %v1055, %v1069
    %v1078 = vcombine.high %v1055, %v1069
    %v1079 = vcombine.low %v1062, %v1076
    %v1080 = vcombine.high %v1062, %v1076
    %v1089 = vsub.f32 %v85, %v1041
    %v1090 = vsub.f32 %v86, %v1077
    %v1091 = vsub.f32 %v87, %v1042
    %v1092 = vsub.f32 %v88, %v1078
    %v1093 = vsub.f32 %v89, %v1043
    %v1094 = vsub.f32 %v90, %v1079
    %v1095 = vsub.f32 %v91, %v1044
    %v1096 = vsub.f32 %v92, %v1080
    %v1097 = vmul.f32 %v586, %v586
    %1098 = vadd.xlane.f32.xlu0 %v1097
    %v1099 = vpop.xlane.xlu0 %1098
    %v1100 = vmul.f32 %v1089, %v1089
    %v1101 = vmul.f32 %v1090, %v1090
    %v1102 = vmul.f32 %v1091, %v1091
    %v1103 = vmul.f32 %v1092, %v1092
    %v1104 = vmul.f32 %v1093, %v1093
    %v1105 = vmul.f32 %v1094, %v1094
    %v1106 = vmul.f32 %v1095, %v1095
    %v1107 = vmul.f32 %v1096, %v1096
    %v1116 = vcombine.low %v1100, %v1102
    %v1117 = vcombine.high %v1100, %v1102
    %v1118 = vcombine.low %v1104, %v1106
    %v1119 = vcombine.high %v1104, %v1106
    %v1121 = vunpack.c.l.s4 1983009808
    %v1122 = vunpack.c.0.s8 %v1121
    %v1123 = vlaneseq
    %v1124 = vshrl.u32 %v1123, 7
    %v1125 = vsub.s32 %v1122, %v1124
    %v1126 = vrot.slane %v1116, %v1125
    %v1128 = vunpack.c.l.s4 1983009808
    %v1129 = vunpack.c.0.s8 %v1128
    %v1130 = vlaneseq
    %v1131 = vshrl.u32 %v1130, 7
    %v1132 = vsub.s32 %v1129, %v1131
    %v1133 = vrot.slane %v1117, %v1132
    %v1135 = vunpack.c.l.s4 1983009808
    %v1136 = vunpack.c.0.s8 %v1135
    %v1137 = vlaneseq
    %v1138 = vshrl.u32 %v1137, 7
    %v1139 = vsub.s32 %v1136, %v1138
    %v1140 = vrot.slane %v1118, %v1139
    %v1142 = vunpack.c.l.s4 1983009808
    %v1143 = vunpack.c.0.s8 %v1142
    %v1144 = vlaneseq
    %v1145 = vshrl.u32 %v1144, 7
    %v1146 = vsub.s32 %v1143, %v1145
    %v1147 = vrot.slane %v1119, %v1146
    %v1148 = vcombine.low %v1126, %v1140
    %v1149 = vcombine.high %v1126, %v1140
    %v1150 = vcombine.low %v1133, %v1147
    %v1151 = vcombine.high %v1133, %v1147
    %v1152 = vcombine.low %v1101, %v1103
    %v1153 = vcombine.high %v1101, %v1103
    %v1154 = vcombine.low %v1105, %v1107
    %v1155 = vcombine.high %v1105, %v1107
    %v1157 = vunpack.c.l.s4 1983009808
    %v1158 = vunpack.c.0.s8 %v1157
    %v1159 = vlaneseq
    %v1160 = vshrl.u32 %v1159, 7
    %v1161 = vsub.s32 %v1158, %v1160
    %v1162 = vrot.slane %v1152, %v1161
    %v1164 = vunpack.c.l.s4 1983009808
    %v1165 = vunpack.c.0.s8 %v1164
    %v1166 = vlaneseq
    %v1167 = vshrl.u32 %v1166, 7
    %v1168 = vsub.s32 %v1165, %v1167
    %v1169 = vrot.slane %v1153, %v1168
    %v1171 = vunpack.c.l.s4 1983009808
    %v1172 = vunpack.c.0.s8 %v1171
    %v1173 = vlaneseq
    %v1174 = vshrl.u32 %v1173, 7
    %v1175 = vsub.s32 %v1172, %v1174
    %v1176 = vrot.slane %v1154, %v1175
    %v1178 = vunpack.c.l.s4 1983009808
    %v1179 = vunpack.c.0.s8 %v1178
    %v1180 = vlaneseq
    %v1181 = vshrl.u32 %v1180, 7
    %v1182 = vsub.s32 %v1179, %v1181
    %v1183 = vrot.slane %v1155, %v1182
    %v1184 = vcombine.low %v1162, %v1176
    %v1185 = vcombine.high %v1162, %v1176
    %v1186 = vcombine.low %v1169, %v1183
    %v1187 = vcombine.high %v1169, %v1183
    %v1196 = vadd.f32 %v1148, %v1149
    %v1197 = vadd.f32 %v1196, %v1150
    %v1198 = vadd.f32 %v1197, %v1151
    %v1199 = vadd.f32 %v1198, %v1184
    %v1200 = vadd.f32 %v1199, %v1185
    %v1201 = vadd.f32 %v1200, %v1186
    %v1202 = vadd.f32 %v1201, %v1187
    %1203 = vadd.xlane.f32.xlu0 %v1202
    %v1204 = vpop.xlane.xlu0 %1203
    %s1205 = sadd.s32 0, 0
    %s1206 = smul.u32 %s1205, 8
    %v1207 = vlaneseq
    %v1208 = vshrl.u32 %v1207, 7
    %v1209 = vstv %s1206
    %v1210 = vadd.s32 %v1209, %v1208
    %vm1211 = vcmp.lt.s32.totalorder %v1210, 2
    %v1212 = vsel %vm1211, %v1099, 0.0
    %v1213 = vsel %vm1211, %v1204, 0.0
    %v1214 = vld [vmem:[#allocation9] sm:$0x1]
    %v1215 = vrot.slane %v1212, 4
    %v1216 = vadd.f32 %v1212, %v1215
    %v1217 = vrot.slane %v1216, 2
    %v1218 = vadd.f32 %v1216, %v1217
    %v1219 = vrot.slane %v1218, 1
    %v1220 = vadd.f32 %v1218, %v1219
    %v1221 = vadd.f32 %v1214, %v1220
    %vm1222 = vcmask 0
    %1223 = vst.msk [vmem:[#allocation9] sm:$0x1] %vm1222, %v1221
    %v1224 = vld [vmem:[#allocation8] sm:$0x1]
    %v1225 = vrot.slane %v1213, 4
    %v1226 = vadd.f32 %v1213, %v1225
    %v1227 = vrot.slane %v1226, 2
    %v1228 = vadd.f32 %v1226, %v1227
    %v1229 = vrot.slane %v1228, 1
    %v1230 = vadd.f32 %v1228, %v1229
    %v1231 = vadd.f32 %v1224, %v1230
    %1232 = vst.msk [vmem:[#allocation8] sm:$0x1] %vm1222, %v1231
    // Predicated region
    $region30: #{tpu_custom_call.1} parent=1 // pred_check
      _
    $region31: #{tpu_custom_call.1} parent=1 // pred_check_branch
      %1234 = sbr.rel (0) target = $region33
    $region32: #{tpu_custom_call.1} parent=1 // pred_region
      %s1236 = ssub.s32 16, 16
      %1237 = vsyncadd [#allocation4], %s1236
      %s1239 = sshll.u32 [#allocation8], 4
      %s1240 = int_to_ptr.vmem [resolvable:$true] %s1239
      %1242 = dma.vmem_to_hbm [thread:$0]  %s1240, 16, %s3, [#allocation4]
    $region33: #{tpu_custom_call.1} parent=1 // pred_fallthru
      _
    // Predicated region
    $region34: #{tpu_custom_call.1} parent=1 // pred_check
      _
    $region35: #{tpu_custom_call.1} parent=1 // pred_check_branch
      %1244 = sbr.rel (0) target = $region37
    $region36: #{tpu_custom_call.1} parent=1 // pred_region
      %s1246 = ssub.s32 16, 16
      %1247 = vsyncadd [#allocation10], %s1246
      %s1249 = sshll.u32 [#allocation9], 4
      %s1250 = int_to_ptr.vmem [resolvable:$true] %s1249
      %1252 = dma.vmem_to_hbm [thread:$0]  %s1250, 16, %s4, [#allocation10]
    $region37: #{tpu_custom_call.1} parent=1 // pred_fallthru
      _
    // Predicated region
    $region38: #{tpu_custom_call.1} parent=1 // pred_check
      _
    $region39: #{tpu_custom_call.1} parent=1 // pred_check_branch
      %1254 = sbr.rel (0) target = $region41
    $region40: #{tpu_custom_call.1} parent=1 // pred_region
      %1255 = dma.done [#allocation4], 16
    $region41: #{tpu_custom_call.1} parent=1 // pred_fallthru
      _
    // Predicated region
    $region42: #{tpu_custom_call.1} parent=1 // pred_check
      _
    $region43: #{tpu_custom_call.1} parent=1 // pred_check_branch
      %1257 = sbr.rel (0) target = $region45
    $region44: #{tpu_custom_call.1} parent=1 // pred_region
      %1258 = dma.done [#allocation10], 16
    $region45: #{tpu_custom_call.1} parent=1 // pred_fallthru
      _
    %1259 = vsyncpa [#allocation3], 1
    %1260 = vsyncpa [#allocation6], 1
    %1261 = vsyncpa [#allocation4], 1
    %1262 = vsyncpa [#allocation10], 1

</llo_original>
